<compile_context>
chip_gen: v7x
topology: tpu7x:2x2x1
jax: 0.10.0
libtpu: 0.0.40
codegen_flags: <defaults>
</compile_context>

<pallas_src>
import functools

import jax
import jax.numpy as jnp
from jax.experimental import pallas as pl
from jax.experimental.pallas import tpu as pltpu


def _round_up(n: int, m: int) -> int:
    return pl.cdiv(n, m) * m


def _pick_seq_tile(seq_len: int):
    """Largest tile in {512,...,16} keeping sequence-padding waste small."""
    for cand in (512, 256, 128, 64, 32, 16):
        s_pad = _round_up(seq_len, cand)
        if s_pad - seq_len <= max(int(0.15 * seq_len), 15):
            return cand, s_pad
    return 16, _round_up(seq_len, 16)


@functools.lru_cache(maxsize=1)
def _f32_mish_gate() -> bool:
    """True -> keep the Mish exp in f32 (v5e and older have no bf16 EUP)."""
    try:
        kind = jax.devices()[0].device_kind.lower()
    except Exception:
        return True
    return not any(tag in kind for tag in ("v6", "v7", "7x"))


def sinusoidal_pe(seq_len: int, d_model: int) -> jnp.ndarray:
    assert d_model % 2 == 0, "sinusoidal PE assumes an even d_model"
    pos = jnp.arange(seq_len, dtype=jnp.float32)[:, None]
    div = jnp.exp(
        jnp.arange(0, d_model, 2, dtype=jnp.float32) * (-jnp.log(10000.0) / d_model)
    )
    pe = jnp.zeros((seq_len, d_model), jnp.float32)
    pe = pe.at[:, 0::2].set(jnp.sin(pos * div))
    pe = pe.at[:, 1::2].set(jnp.cos(pos * div))
    return pe


def fuse_pe_kernel(x_ref, w1_ref, b1_ref, w2_ref, b2_ref, pe_ref, o_ref, *, f32_gate):
    """Fused Linear -> Mish -> Linear + positional-encoding add for one row tile.

    x_ref : (ts, total_pad)         bf16
    w1_ref: (total_pad, hidden_pad) bf16   (resident, single-buffered)
    b1_ref: (1, hidden_pad)         f32
    w2_ref: (hidden_pad, d_pad)     bf16   (resident, single-buffered)
    b2_ref: (1, d_pad)              f32
    pe_ref: (ts, d_pad)             f32    (shared across the batch axis)
    o_ref : (ts, d_pad)             f32
    """
    # Linear 1 on the MXU: bf16 x bf16 -> f32 accumulate.
    h = jnp.dot(x_ref[...], w1_ref[...], preferred_element_type=jnp.float32)
    h = h + b1_ref[...]

    # Mish: h * tanh(softplus(h)) == h * t(t+2) / (t(t+2)+2), t = exp(h).
    # Clamp the exp argument; for h > 20 the gate is 1 to f32 precision anyway.
    hc = jnp.minimum(h, 20.0)
    if f32_gate:
        t = jnp.exp(hc)                                            # f32 EUP (v5e-safe)
    else:
        t = jnp.exp(hc.astype(jnp.bfloat16)).astype(jnp.float32)   # bf16 EUP (v6e/v7x)
    num = t * (t + 2.0)
    gate = num * pl.reciprocal(num + 2.0, approx=True)             # f32 rcp (Mosaic)
    h = (h * gate).astype(jnp.bfloat16)

    # Linear 2 on the MXU + bias + additive sinusoidal PE.
    y = jnp.dot(h, w2_ref[...], preferred_element_type=jnp.float32)
    o_ref[...] = (y + b2_ref[...] + pe_ref[...]).astype(o_ref.dtype)


def _resident_spec(shape):
    """Constant-index resident operand; single-buffered to save VMEM."""
    try:
        return pl.BlockSpec(shape, lambda i: (0, 0), pipeline_mode=pl.Buffered(1))
    except TypeError:  # older jax without pipeline_mode: fall back to default
        return pl.BlockSpec(shape, lambda i: (0, 0))


def prepare_params(embed, w1, b1, w2, b2):
    """One-time prep (hoisted out of the per-call path): transpose, cast to the
    MXU operand dtype and zero-pad to lane/MXU-friendly multiples of 128."""
    d_model = embed.shape[1]
    hidden, total = w1.shape
    total_pad = _round_up(total, 128)
    hidden_pad = _round_up(hidden, 128)
    d_pad = _round_up(d_model, 128)

    embed_b = embed.astype(jnp.bfloat16)
    w1_t = jnp.zeros((total_pad, hidden_pad), jnp.bfloat16)
    w1_t = w1_t.at[:total, :hidden].set(w1.T.astype(jnp.bfloat16))
    b1_r = jnp.zeros((1, hidden_pad), jnp.float32).at[0, :hidden].set(
        b1.astype(jnp.float32))
    w2_t = jnp.zeros((hidden_pad, d_pad), jnp.bfloat16)
    w2_t = w2_t.at[:hidden, :d_model].set(w2.T.astype(jnp.bfloat16))
    b2_r = jnp.zeros((1, d_pad), jnp.float32).at[0, :d_model].set(
        b2.astype(jnp.float32))
    return embed_b, w1_t, b1_r, w2_t, b2_r


@jax.jit
def event_encoder(events, embed_b, w1_t, b1_r, w2_t, b2_r):
    """events: [B, S, F] int32; prepared params from prepare_params().
    Returns [B, S, d_model] float32."""
    B, S, F = events.shape
    d_model = embed_b.shape[1]
    total = d_model * F
    total_pad, hidden_pad = w1_t.shape
    d_pad = w2_t.shape[1]

    ts, s_pad = _pick_seq_tile(S)
    tiles_per_batch = s_pad // ts
    m_pad = B * s_pad

    # --- glue: shared-table bf16 embedding gather + concat, lane-dense padding ---
    x = jnp.take(embed_b, events, axis=0).reshape(B, S, total)          # bf16
    x = jnp.pad(x, ((0, 0), (0, s_pad - S), (0, total_pad - total)))
    x = x.reshape(m_pad, total_pad)

    # Single PE table shared across the batch, zero-padded to d_pad lanes.
    pe = jnp.pad(sinusoidal_pe(s_pad, d_model), ((0, 0), (0, d_pad - d_model)))

    # Explicit scoped-VMEM budget (defaults: 16 MiB v5e / 32 MiB v6e+).
    resident = (total_pad * hidden_pad + hidden_pad * d_pad) * 2 + (hidden_pad + d_pad) * 4
    streamed = 2 * ts * total_pad * 2 + 4 * ts * d_pad * 4
    scratch = 2 * ts * hidden_pad * 4
    vmem_limit = int(min(max(resident + streamed + scratch + (8 << 20), 32 << 20),
                         128 << 20))

    cost = pl.CostEstimate(
        flops=2 * m_pad * (total_pad * hidden_pad + hidden_pad * d_pad),
        transcendentals=2 * m_pad * hidden_pad,
        bytes_accessed=(m_pad * total_pad * 2 + resident
                        + s_pad * d_pad * 4 + m_pad * d_pad * 4),
    )

    kernel = functools.partial(fuse_pe_kernel, f32_gate=_f32_mish_gate())

    out = pl.pallas_call(
        kernel,
        out_shape=jax.ShapeDtypeStruct((m_pad, d_pad), jnp.float32),
        grid_spec=pltpu.PrefetchScalarGridSpec(
            num_scalar_prefetch=0,
            grid=(m_pad // ts,),
            in_specs=[
                pl.BlockSpec((ts, total_pad), lambda i: (i, 0)),         # x row tile
                _resident_spec((total_pad, hidden_pad)),                 # W1^T
                _resident_spec((1, hidden_pad)),                         # b1
                _resident_spec((hidden_pad, d_pad)),                     # W2^T
                _resident_spec((1, d_pad)),                              # b2
                pl.BlockSpec((ts, d_pad),
                             lambda i: (i % tiles_per_batch, 0)),        # PE (seq tile)
            ],
            out_specs=pl.BlockSpec((ts, d_pad), lambda i: (i, 0)),
        ),
        compiler_params=pltpu.CompilerParams(
            dimension_semantics=("parallel",),      # v7x megacore splits row tiles
            vmem_limit_bytes=vmem_limit,
        ),
        cost_estimate=cost,
    )(x, w1_t, b1_r, w2_t, b2_r, pe)

    # TODO(synk): return the padded slab if the consumer tolerates it (this slice
    # is a full-output HBM round trip in XLA).
    return out.reshape(B, s_pad, d_pad)[:, :S, :d_model]


def init_params(key, d_categories, d_model):
    """Deterministic synthetic parameter init matching the module's shapes."""
    max_card = max(d_categories)
    total = d_model * len(d_categories)
    hidden = 4 * total
    k_emb, k_w1, k_b1, k_w2, k_b2 = jax.random.split(key, 5)

    embed = jax.random.normal(k_emb, (max_card, d_model), jnp.float32)

    lim1 = 1.0 / jnp.sqrt(total)
    w1 = jax.random.uniform(k_w1, (hidden, total), jnp.float32, -lim1, lim1)
    b1 = jax.random.uniform(k_b1, (hidden,), jnp.float32, -lim1, lim1)

    lim2 = 1.0 / jnp.sqrt(hidden)
    w2 = jax.random.uniform(k_w2, (d_model, hidden), jnp.float32, -lim2, lim2)
    b2 = jax.random.uniform(k_b2, (d_model,), jnp.float32, -lim2, lim2)

    return embed, w1, b1, w2, b2


if __name__ == "__main__":
    B, S = 2, 8
    d_categories = [5, 7, 3]
    d_model = 32

    key = jax.random.PRNGKey(0)
    k_params, *k_events = jax.random.split(key, 1 + len(d_categories))

    embed, w1, b1, w2, b2 = init_params(k_params, d_categories, d_model)
    prepped = prepare_params(embed, w1, b1, w2, b2)   # one-time hoisted weight prep

    # events[..., i] in [0, d_categories[i])
    cols = [
        jax.random.randint(k_events[i], (B, S, 1), 0, d_categories[i], jnp.int32)
        for i in range(len(d_categories))
    ]
    events = jnp.concatenate(cols, axis=-1)  # [B, S, F]

    out = event_encoder(events, *prepped)
    jax.block_until_ready(out)

    # Pure-JAX f32 reference (exact Mish).  The kernel uses bf16 MXU operands,
    # an approx reciprocal and (on v6e/v7x) a bf16 exp in the Mish gate, so the
    # tolerance is loosened accordingly.
    total = d_model * len(d_categories)
    emb = jnp.take(embed, events, axis=0).reshape(B * S, total)
    h = emb @ w1.T + b1
    h = h * jnp.tanh(jnp.logaddexp(h, 0.0))
    y = h @ w2.T + b2
    ref = y.reshape(B, S, d_model) + sinusoidal_pe(S, d_model)[None]

    assert out.shape == ref.shape, (out.shape, ref.shape)
    max_err = jnp.max(jnp.abs(out - ref))
    assert max_err < 1e-1, f"mismatch vs reference (max abs err {max_err})"

    print("KERNEL_OK")
</pallas_src>

<mosaic_0001>
module attributes {stable_mosaic.version = 11 : i64} {
  func.func @fuse_pe_kernel(%arg0: i32, %arg1: memref<16x128xbf16, #tpu.memory_space<vmem>>, %arg2: memref<128x384xbf16, #tpu.memory_space<vmem>>, %arg3: memref<1x384xf32, #tpu.memory_space<vmem>>, %arg4: memref<384x128xbf16, #tpu.memory_space<vmem>>, %arg5: memref<1x128xf32, #tpu.memory_space<vmem>>, %arg6: memref<16x128xf32, #tpu.memory_space<vmem>>, %arg7: memref<16x128xf32, #tpu.memory_space<vmem>>) attributes {dimension_semantics = [#tpu.dimension_semantics<parallel>], iteration_bounds = array<i64: 2>, scalar_prefetch = 0 : i64, scratch_operands = 0 : i64, tpu.core_type = #tpu.core_type<tc>, window_params = [{transform_indices = @transform_0, window_bounds = array<i64: 16, 128>}, {pipeline_mode = #tpu.pipeline_mode<synchronous>, transform_indices = @transform_1, window_bounds = array<i64: 128, 384>}, {pipeline_mode = #tpu.pipeline_mode<synchronous>, transform_indices = @transform_2, window_bounds = array<i64: 1, 384>}, {pipeline_mode = #tpu.pipeline_mode<synchronous>, transform_indices = @transform_3, window_bounds = array<i64: 384, 128>}, {pipeline_mode = #tpu.pipeline_mode<synchronous>, transform_indices = @transform_4, window_bounds = array<i64: 1, 128>}, {transform_indices = @transform_5, window_bounds = array<i64: 16, 128>}, {transform_indices = @transform_6, window_bounds = array<i64: 16, 128>}]} {
    %c0 = arith.constant 0 : index
    %c0_0 = arith.constant 0 : index
    %0 = vector.load %arg1[%c0, %c0_0] : memref<16x128xbf16, #tpu.memory_space<vmem>>, vector<16x128xbf16>
    %c0_1 = arith.constant 0 : index
    %c0_2 = arith.constant 0 : index
    %1 = vector.load %arg2[%c0_1, %c0_2] : memref<128x384xbf16, #tpu.memory_space<vmem>>, vector<128x384xbf16>
    %cst = arith.constant dense<0.000000e+00> : vector<16x384xf32>
    %2 = tpu.matmul %0, %1, %cst {dimension_numbers = #tpu.dot_dimension_numbers<[1], [0], [0], [1], [0, 0, 1, 1], [], []>} : vector<16x128xbf16>, vector<128x384xbf16>, vector<16x384xf32> -> vector<16x384xf32>
    %c0_3 = arith.constant 0 : index
    %c0_4 = arith.constant 0 : index
    %3 = vector.load %arg3[%c0_3, %c0_4] : memref<1x384xf32, #tpu.memory_space<vmem>>, vector<1x384xf32>
    %4 = vector.broadcast %3 : vector<1x384xf32> to vector<16x384xf32>
    %5 = arith.addf %2, %4 : vector<16x384xf32>
    %cst_5 = arith.constant 2.000000e+01 : f32
    %6 = vector.broadcast %cst_5 : f32 to vector<16x384xf32>
    %7 = arith.minimumf %5, %6 : vector<16x384xf32>
    %8 = math.exp %7 : vector<16x384xf32>
    %cst_6 = arith.constant 2.000000e+00 : f32
    %9 = vector.broadcast %cst_6 : f32 to vector<16x384xf32>
    %10 = arith.addf %8, %9 : vector<16x384xf32>
    %11 = arith.mulf %8, %10 : vector<16x384xf32>
    %cst_7 = arith.constant 2.000000e+00 : f32
    %12 = vector.broadcast %cst_7 : f32 to vector<16x384xf32>
    %13 = arith.addf %11, %12 : vector<16x384xf32>
    %14 = tpu.reciprocal %13 {approx = true} : vector<16x384xf32> -> vector<16x384xf32>
    %15 = arith.mulf %11, %14 : vector<16x384xf32>
    %16 = arith.mulf %5, %15 : vector<16x384xf32>
    %17 = arith.truncf %16 : vector<16x384xf32> to vector<16x384xbf16>
    %c0_8 = arith.constant 0 : index
    %c0_9 = arith.constant 0 : index
    %18 = vector.load %arg4[%c0_8, %c0_9] : memref<384x128xbf16, #tpu.memory_space<vmem>>, vector<384x128xbf16>
    %cst_10 = arith.constant dense<0.000000e+00> : vector<16x128xf32>
    %19 = tpu.matmul %17, %18, %cst_10 {dimension_numbers = #tpu.dot_dimension_numbers<[1], [0], [0], [1], [0, 0, 1, 1], [], []>} : vector<16x384xbf16>, vector<384x128xbf16>, vector<16x128xf32> -> vector<16x128xf32>
    %c0_11 = arith.constant 0 : index
    %c0_12 = arith.constant 0 : index
    %20 = vector.load %arg5[%c0_11, %c0_12] : memref<1x128xf32, #tpu.memory_space<vmem>>, vector<1x128xf32>
    %21 = vector.broadcast %20 : vector<1x128xf32> to vector<16x128xf32>
    %22 = arith.addf %19, %21 : vector<16x128xf32>
    %c0_13 = arith.constant 0 : index
    %c0_14 = arith.constant 0 : index
    %23 = vector.load %arg6[%c0_13, %c0_14] : memref<16x128xf32, #tpu.memory_space<vmem>>, vector<16x128xf32>
    %24 = arith.addf %22, %23 : vector<16x128xf32>
    %c0_15 = arith.constant 0 : index
    %c0_16 = arith.constant 0 : index
    %25 = vector.load %arg7[%c0_15, %c0_16] : memref<16x128xf32, #tpu.memory_space<vmem>>, vector<16x128xf32>
    tpu.vector_store %arg7[%c0_15, %c0_16], %24 {strides = array<i32>} : memref<16x128xf32, #tpu.memory_space<vmem>>, vector<16x128xf32>,
    return
  }
  func.func @transform_0(%arg0: i32) -> (i32, i32) {
    %c0_i32 = arith.constant 0 : i32
    %c0_i32_0 = arith.constant 0 : i32
    return %arg0, %c0_i32 : i32, i32
  }
  func.func @transform_1(%arg0: i32) -> (i32, i32) {
    %c0_i32 = arith.constant 0 : i32
    %c0_i32_0 = arith.constant 0 : i32
    %c0_i32_1 = arith.constant 0 : i32
    return %c0_i32, %c0_i32_0 : i32, i32
  }
  func.func @transform_2(%arg0: i32) -> (i32, i32) {
    %c0_i32 = arith.constant 0 : i32
    %c0_i32_0 = arith.constant 0 : i32
    %c0_i32_1 = arith.constant 0 : i32
    return %c0_i32, %c0_i32_0 : i32, i32
  }
  func.func @transform_3(%arg0: i32) -> (i32, i32) {
    %c0_i32 = arith.constant 0 : i32
    %c0_i32_0 = arith.constant 0 : i32
    %c0_i32_1 = arith.constant 0 : i32
    return %c0_i32, %c0_i32_0 : i32, i32
  }
  func.func @transform_4(%arg0: i32) -> (i32, i32) {
    %c0_i32 = arith.constant 0 : i32
    %c0_i32_0 = arith.constant 0 : i32
    %c0_i32_1 = arith.constant 0 : i32
    return %c0_i32, %c0_i32_0 : i32, i32
  }
  func.func @transform_5(%arg0: i32) -> (i32, i32) {
    %c1_i32 = arith.constant 1 : i32
    %c0_i32 = arith.constant 0 : i32
    %0 = arith.cmpi eq, %c1_i32, %c0_i32 : i32
    %c1_i32_0 = arith.constant 1 : i32
    %1 = arith.select %0, %c1_i32_0, %c1_i32 : i32
    %2 = arith.remsi %arg0, %1 : i32
    %c0_i32_1 = arith.constant 0 : i32
    %3 = arith.cmpi ne, %2, %c0_i32_1 : i32
    %c0_i32_2 = arith.constant 0 : i32
    %4 = arith.cmpi slt, %2, %c0_i32_2 : i32
    %c0_i32_3 = arith.constant 0 : i32
    %5 = arith.cmpi slt, %1, %c0_i32_3 : i32
    %6 = arith.xori %4, %5 : i1
    %7 = arith.andi %6, %3 : i1
    %8 = arith.addi %2, %1 : i32
    %9 = arith.select %7, %8, %2 : i32
    %c0_i32_4 = arith.constant 0 : i32
    %c0_i32_5 = arith.constant 0 : i32
    return %9, %c0_i32_4 : i32, i32
  }
  func.func @transform_6(%arg0: i32) -> (i32, i32) {
    %c0_i32 = arith.constant 0 : i32
    %c0_i32_0 = arith.constant 0 : i32
    return %arg0, %c0_i32 : i32, i32
  }
}

</mosaic_0001>

<llo_original>
// kernel: event_encoder.1
$region0: #{event_encoder.1}
  #allocation0 [shape = 'u32[]', space=smem, size = 0x4, offset = 0x4, fixed_abs, tag = 'smem constant byte address 0x4 - core index']
  #allocation1 [shape = 'u32[144,128]{1,0:T(1,128)}', space=vmem, size = 0x12000, scoped, tag = 'internal scratch']
  %s0 = inlined_call_operand.vmem [shape: bf16[32,128], index: 0, kind: input, shape index: {}]
  %s1 = inlined_call_operand.vmem [shape: bf16[128,384], index: 1, kind: input, shape index: {}]
  %s2 = inlined_call_operand.vmem [shape: f32[1,384], index: 2, kind: input, shape index: {}]
  %s3 = inlined_call_operand.vmem [shape: bf16[384,128], index: 3, kind: input, shape index: {}]
  %s4 = inlined_call_operand.vmem [shape: f32[1,128], index: 4, kind: input, shape index: {}]
  %s5 = inlined_call_operand.vmem [shape: f32[16,128], index: 5, kind: input, shape index: {}]
  %s6 = inlined_call_operand.vmem [shape: f32[32,128], index: 6, kind: output, shape index: {}]
  %s7 = sld [smem:[#allocation0]]
  $region57: #{event_encoder.1} parent=0
    _
  %s9 = ssub.s32 1, %s7
  %s10 = scalar_select 0, %s9, %s7
  loop: start=0, step=1, limit=4
  $region2: #{event_encoder.1} parent=0 // loop_pre_header
    _
  $region3: #{event_encoder.1} parent=0 // loop_header
    %s12 = sphi 0, %s16
    %p13 = scmp.ge.s32.totalorder %s12, 4
    %s22 = sphi 0, %s24
    %s25 = sphi 0, %s22
    %s26 = sphi 0, %s25
    %s42 = sphi 0, %s26
    %s46 = sphi 0, %s46
    %s48 = sphi 0, %s46
    %s49 = sphi 0, %s48
    %s63 = sphi 0, %s49
    %s67 = sphi 0, %s67
    %s69 = sphi 0, %s67
    %s70 = sphi 0, %s69
    %s84 = sphi 0, %s70
    %s88 = sphi 0, %s88
    %s90 = sphi 0, %s88
    %s91 = sphi 0, %s90
    %s105 = sphi 0, %s91
    %s109 = sphi 0, %s109
    %s111 = sphi 0, %s109
    %s112 = sphi 0, %s111
    %s126 = sphi 0, %s112
    %s130 = sphi 0, %s130
    %s132 = sphi 0, %s130
    %s133 = sphi 0, %s132
    %s147 = sphi 0, %s133
    %s153 = sphi 0, %s155
    %s156 = sphi 0, %s153
    %s157 = sphi 0, %s156
    %s173 = sphi 0, %s157
  $region4: #{event_encoder.1} parent=0 // loop_header_branch
    %15 = sbr.rel (%p13) target = $region8
  $region5: #{event_encoder.1} parent=0 // loop_body
    %s17 = ssub.s32 %s12, 1
    %s18 = ssub.s32 %s12, 2
    %s19 = sadd.s32 %s12, 1
    %s20 = ssub.s32 %s12, %s19
    %p21 = scmp.eq.s32.totalorder %s20, 0
    %s23 = sadd.s32 %s22, 1
    %s24 = scalar_select %p21, %s22, %s23
    %p27 = pneg %p21
    %p28 = scmp.eq.s32.totalorder %s12, 1
    %p29 = por %p27, %p28
    %p30 = scmp.ne.s32.totalorder %s22, %s25
    %p31 = scmp.eq.s32.totalorder %s12, 0
    %p32 = por %p30, %p31
    %p33 = scmp.ne.s32.totalorder %s22, %s25
    %p34 = scmp.eq.s32.totalorder %s17, 1
    %p35 = por %p33, %p34
    %p36 = scmp.ne.s32.totalorder %s25, %s26
    %p37 = scmp.eq.s32.totalorder %s17, 0
    %p38 = por %p36, %p37
    %p39 = scmp.ne.s32.totalorder %s25, %s26
    %p40 = scmp.eq.s32.totalorder %s18, 1
    %p41 = por %p39, %p40
    %p43 = scmp.ne.s32.totalorder %s26, %s42
    %p44 = scmp.eq.s32.totalorder %s18, 0
    %p45 = por %p43, %p44
    %s47 = sadd.s32 %s46, 1
    %p50 = scmp.eq.s32.totalorder %s12, 1
    %p51 = scmp.ne.s32.totalorder %s46, %s48
    %p52 = scmp.eq.s32.totalorder %s12, 0
    %p53 = por %p51, %p52
    %p54 = scmp.ne.s32.totalorder %s46, %s48
    %p55 = scmp.eq.s32.totalorder %s17, 1
    %p56 = por %p54, %p55
    %p57 = scmp.ne.s32.totalorder %s48, %s49
    %p58 = scmp.eq.s32.totalorder %s17, 0
    %p59 = por %p57, %p58
    %p60 = scmp.ne.s32.totalorder %s48, %s49
    %p61 = scmp.eq.s32.totalorder %s18, 1
    %p62 = por %p60, %p61
    %p64 = scmp.ne.s32.totalorder %s49, %s63
    %p65 = scmp.eq.s32.totalorder %s18, 0
    %p66 = por %p64, %p65
    %s68 = sadd.s32 %s67, 1
    %p71 = scmp.eq.s32.totalorder %s12, 1
    %p72 = scmp.ne.s32.totalorder %s67, %s69
    %p73 = scmp.eq.s32.totalorder %s12, 0
    %p74 = por %p72, %p73
    %p75 = scmp.ne.s32.totalorder %s67, %s69
    %p76 = scmp.eq.s32.totalorder %s17, 1
    %p77 = por %p75, %p76
    %p78 = scmp.ne.s32.totalorder %s69, %s70
    %p79 = scmp.eq.s32.totalorder %s17, 0
    %p80 = por %p78, %p79
    %p81 = scmp.ne.s32.totalorder %s69, %s70
    %p82 = scmp.eq.s32.totalorder %s18, 1
    %p83 = por %p81, %p82
    %p85 = scmp.ne.s32.totalorder %s70, %s84
    %p86 = scmp.eq.s32.totalorder %s18, 0
    %p87 = por %p85, %p86
    %s89 = sadd.s32 %s88, 1
    %p92 = scmp.eq.s32.totalorder %s12, 1
    %p93 = scmp.ne.s32.totalorder %s88, %s90
    %p94 = scmp.eq.s32.totalorder %s12, 0
    %p95 = por %p93, %p94
    %p96 = scmp.ne.s32.totalorder %s88, %s90
    %p97 = scmp.eq.s32.totalorder %s17, 1
    %p98 = por %p96, %p97
    %p99 = scmp.ne.s32.totalorder %s90, %s91
    %p100 = scmp.eq.s32.totalorder %s17, 0
    %p101 = por %p99, %p100
    %p102 = scmp.ne.s32.totalorder %s90, %s91
    %p103 = scmp.eq.s32.totalorder %s18, 1
    %p104 = por %p102, %p103
    %p106 = scmp.ne.s32.totalorder %s91, %s105
    %p107 = scmp.eq.s32.totalorder %s18, 0
    %p108 = por %p106, %p107
    %s110 = sadd.s32 %s109, 1
    %p113 = scmp.eq.s32.totalorder %s12, 1
    %p114 = scmp.ne.s32.totalorder %s109, %s111
    %p115 = scmp.eq.s32.totalorder %s12, 0
    %p116 = por %p114, %p115
    %p117 = scmp.ne.s32.totalorder %s109, %s111
    %p118 = scmp.eq.s32.totalorder %s17, 1
    %p119 = por %p117, %p118
    %p120 = scmp.ne.s32.totalorder %s111, %s112
    %p121 = scmp.eq.s32.totalorder %s17, 0
    %p122 = por %p120, %p121
    %p123 = scmp.ne.s32.totalorder %s111, %s112
    %p124 = scmp.eq.s32.totalorder %s18, 1
    %p125 = por %p123, %p124
    %p127 = scmp.ne.s32.totalorder %s112, %s126
    %p128 = scmp.eq.s32.totalorder %s18, 0
    %p129 = por %p127, %p128
    %s131 = sadd.s32 %s130, 1
    %p134 = scmp.eq.s32.totalorder %s12, 1
    %p135 = scmp.ne.s32.totalorder %s130, %s132
    %p136 = scmp.eq.s32.totalorder %s12, 0
    %p137 = por %p135, %p136
    %p138 = scmp.ne.s32.totalorder %s130, %s132
    %p139 = scmp.eq.s32.totalorder %s17, 1
    %p140 = por %p138, %p139
    %p141 = scmp.ne.s32.totalorder %s132, %s133
    %p142 = scmp.eq.s32.totalorder %s17, 0
    %p143 = por %p141, %p142
    %p144 = scmp.ne.s32.totalorder %s132, %s133
    %p145 = scmp.eq.s32.totalorder %s18, 1
    %p146 = por %p144, %p145
    %p148 = scmp.ne.s32.totalorder %s133, %s147
    %p149 = scmp.eq.s32.totalorder %s18, 0
    %p150 = por %p148, %p149
    %s151 = ssub.s32 %s12, %s19
    %p152 = scmp.eq.s32.totalorder %s151, 0
    %s154 = sadd.s32 %s153, 1
    %s155 = scalar_select %p152, %s153, %s154
    %p158 = pneg %p152
    %p159 = scmp.eq.s32.totalorder %s12, 1
    %p160 = por %p158, %p159
    %p161 = scmp.ne.s32.totalorder %s153, %s156
    %p162 = scmp.eq.s32.totalorder %s12, 0
    %p163 = por %p161, %p162
    %p164 = scmp.ne.s32.totalorder %s153, %s156
    %p165 = scmp.eq.s32.totalorder %s17, 1
    %p166 = por %p164, %p165
    %p167 = scmp.ne.s32.totalorder %s156, %s157
    %p168 = scmp.eq.s32.totalorder %s17, 0
    %p169 = por %p167, %p168
    %p170 = scmp.ne.s32.totalorder %s156, %s157
    %p171 = scmp.eq.s32.totalorder %s18, 1
    %p172 = por %p170, %p171
    %p174 = scmp.ne.s32.totalorder %s157, %s173
    %p175 = scmp.eq.s32.totalorder %s18, 0
    %p176 = por %p174, %p175
    %p177 = scmp.le.s32.totalorder 1, %s12
    %p178 = scmp.lt.s32.totalorder %s12, 3
    %p179 = pnand %p177, %p178
    %p180 = pneg %p179
    // Predicated region
    $region9: #{event_encoder.1} parent=5 // pred_check
      _
    $region10: #{event_encoder.1} parent=5 // pred_check_branch
      %182 = sbr.rel (%p179) target = $region12
    $region11: #{event_encoder.1} parent=5 // pred_region
      %s183 = ssub.s32 %s12, 1
      // Predicated region
      $region13: #{event_encoder.1} parent=11 // pred_check
        %p184 = pneg %p59
      $region14: #{event_encoder.1} parent=11 // pred_check_branch
        %186 = sbr.rel (%p184) target = $region16
      $region15: #{event_encoder.1} parent=11 // pred_region
        _
      $region16: #{event_encoder.1} parent=11 // pred_fallthru
        _
      // Predicated region
      $region17: #{event_encoder.1} parent=11 // pred_check
        %p187 = pneg %p80
      $region18: #{event_encoder.1} parent=11 // pred_check_branch
        %189 = sbr.rel (%p187) target = $region20
      $region19: #{event_encoder.1} parent=11 // pred_region
        _
      $region20: #{event_encoder.1} parent=11 // pred_fallthru
        _
      // Predicated region
      $region21: #{event_encoder.1} parent=11 // pred_check
        %p190 = pneg %p101
      $region22: #{event_encoder.1} parent=11 // pred_check_branch
        %192 = sbr.rel (%p190) target = $region24
      $region23: #{event_encoder.1} parent=11 // pred_region
        _
      $region24: #{event_encoder.1} parent=11 // pred_fallthru
        _
      // Predicated region
      $region25: #{event_encoder.1} parent=11 // pred_check
        %p193 = pneg %p122
      $region26: #{event_encoder.1} parent=11 // pred_check_branch
        %195 = sbr.rel (%p193) target = $region28
      $region27: #{event_encoder.1} parent=11 // pred_region
        _
      $region28: #{event_encoder.1} parent=11 // pred_fallthru
        _
      // Predicated region
      $region29: #{event_encoder.1} parent=11 // pred_check
        %p196 = pneg %p143
      $region30: #{event_encoder.1} parent=11 // pred_check_branch
        %198 = sbr.rel (%p196) target = $region32
      $region31: #{event_encoder.1} parent=11 // pred_region
        _
      $region32: #{event_encoder.1} parent=11 // pred_fallthru
        _
    $region12: #{event_encoder.1} parent=5 // pred_fallthru
      _
    %p199 = scmp.lt.s32.totalorder %s12, 2
    // Predicated region
    $region33: #{event_encoder.1} parent=5 // pred_check
      %p200 = pneg %p199
    $region34: #{event_encoder.1} parent=5 // pred_check_branch
      %202 = sbr.rel (%p200) target = $region36
    $region35: #{event_encoder.1} parent=5 // pred_region
      // Predicated region
      $region37: #{event_encoder.1} parent=35 // pred_check
        %p203 = pneg %p32
      $region38: #{event_encoder.1} parent=35 // pred_check_branch
        %205 = sbr.rel (%p203) target = $region40
      $region39: #{event_encoder.1} parent=35 // pred_region
        %s206 = smul.u32 2, %s12
        %p207 = scmp.lt.s32.totalorder %s206, 3
        %s208 = scalar_select %p207, %s206, 3
        %s209 = smul.addr %s208, 4
        %s210 = scalar_lea.vmem %s0, %s209
        %s211 = smul.u32 2, %s12
      $region40: #{event_encoder.1} parent=35 // pred_fallthru
        _
    $region36: #{event_encoder.1} parent=5 // pred_fallthru
      _
    %p212 = scmp.le.s32.totalorder 1, %s12
    %p213 = scmp.lt.s32.totalorder %s12, 3
    %p214 = pnand %p212, %p213
    %p215 = pneg %p214
    // Predicated region
    $region41: #{event_encoder.1} parent=5 // pred_check
      _
    $region42: #{event_encoder.1} parent=5 // pred_check_branch
      %217 = sbr.rel (%p214) target = $region44
    $region43: #{event_encoder.1} parent=5 // pred_region
      %s218 = ssub.s32 %s12, 1
      %s219 = smul.u32 2, %s17
      %p220 = scmp.lt.s32.totalorder %s219, 3
      %s221 = scalar_select %p220, %s219, 3
      %s222 = smul.addr %s221, 4
      %s223 = scalar_lea.vmem %s0, %s222
      %p224 = pneg %p38
      %p225 = pneg %p35
      %p226 = pneg %p59
      %p227 = pneg %p56
      %p228 = pneg %p80
      %p229 = pneg %p77
      %p230 = pneg %p101
      %p231 = pneg %p98
      %p232 = pneg %p122
      %p233 = pneg %p119
      %p234 = pneg %p143
      %p235 = pneg %p140
      %p236 = pneg %p169
      %p237 = pneg %p166
      %s238 = smul.u32 2, %s17
      %p239 = scmp.lt.s32.totalorder %s238, 3
      %s240 = scalar_select %p239, %s238, 3
      %s241 = smul.addr %s240, 8
      %s242 = scalar_lea.vmem %s6, %s241
      %s243 = smul.u32 2, %s17
      %p244 = scmp.lt.s32.totalorder %s243, 3
      %s245 = scalar_select %p244, %s243, 3
      %s246 = smul.addr %s245, 4
      %s247 = scalar_lea.vmem %s0, %s246
      %s248 = smul.u32 2, %s17
      %s249 = smul.u32 2, %s17
      %p250 = scmp.lt.s32.totalorder %s249, 3
      %s251 = scalar_select %p250, %s249, 3
      %s252 = smul.addr %s251, 8
      %s253 = scalar_lea.vmem %s6, %s252
      %s254 = smul.u32 2, %s17
      %v256 = vld [vmem:[%s247] sm:$0xf]
      %v257 = vld [vmem:[%s247 + $0x4] sm:$0xf]
      %v258 = vld [vmem:[%s1] sm:$0xff]
      %v259 = vld [vmem:[%s1 + $0x8] sm:$0xf]
      %v260 = vld [vmem:[%s1 + $0xc] sm:$0xff]
      %v261 = vld [vmem:[%s1 + $0x14] sm:$0xf]
      %v262 = vld [vmem:[%s1 + $0x18] sm:$0xff]
      %v263 = vld [vmem:[%s1 + $0x20] sm:$0xf]
      %v264 = vld [vmem:[%s1 + $0x24] sm:$0xff]
      %v265 = vld [vmem:[%s1 + $0x2c] sm:$0xf]
      %v266 = vld [vmem:[%s1 + $0x30] sm:$0xff]
      %v267 = vld [vmem:[%s1 + $0x38] sm:$0xf]
      %v268 = vld [vmem:[%s1 + $0x3c] sm:$0xff]
      %v269 = vld [vmem:[%s1 + $0x44] sm:$0xf]
      %v270 = vld [vmem:[%s1 + $0x48] sm:$0xff]
      %v271 = vld [vmem:[%s1 + $0x50] sm:$0xf]
      %v272 = vld [vmem:[%s1 + $0x54] sm:$0xff]
      %v273 = vld [vmem:[%s1 + $0x5c] sm:$0xf]
      %v274 = vld [vmem:[%s1 + $0x60] sm:$0xff]
      %v275 = vld [vmem:[%s1 + $0x68] sm:$0xf]
      %v276 = vld [vmem:[%s1 + $0x6c] sm:$0xff]
      %v277 = vld [vmem:[%s1 + $0x74] sm:$0xf]
      %v278 = vld [vmem:[%s1 + $0x78] sm:$0xff]
      %v279 = vld [vmem:[%s1 + $0x80] sm:$0xf]
      %v280 = vld [vmem:[%s1 + $0x84] sm:$0xff]
      %v281 = vld [vmem:[%s1 + $0x8c] sm:$0xf]
      %v282 = vld [vmem:[%s1 + $0x90] sm:$0xff]
      %v283 = vld [vmem:[%s1 + $0x98] sm:$0xf]
      %v284 = vld [vmem:[%s1 + $0x9c] sm:$0xff]
      %v285 = vld [vmem:[%s1 + $0xa4] sm:$0xf]
      %v286 = vld [vmem:[%s1 + $0xa8] sm:$0xff]
      %v287 = vld [vmem:[%s1 + $0xb0] sm:$0xf]
      %v288 = vld [vmem:[%s1 + $0xb4] sm:$0xff]
      %v289 = vld [vmem:[%s1 + $0xbc] sm:$0xf]
      %v290 = vld [vmem:[%s2] sm:$0x7]
      %v292 = vlaneseq
      %v293 = vshrl.u32 %v292, 7
      %v294 = vsub.s32 0, %v293
      %v295 = vrot.slane %v290, %v294
      %v296 = vlaneseq
      %v297 = vshrl.u32 %v296, 7
      %v298 = vsub.s32 1, %v297
      %v299 = vrot.slane %v290, %v298
      %v300 = vlaneseq
      %v301 = vshrl.u32 %v300, 7
      %v302 = vsub.s32 2, %v301
      %v303 = vrot.slane %v290, %v302
      %v309 = vunpack.c.l.b16 %v256
      %v310 = vunpack.c.l.b16 %v257
      %v311 = vpack.c.b16 %v310, %v309
      %v345 = vunpack.c.l.b16 %v258
      %v346 = vunpack.c.h.b16 %v258
      %v347 = vunpack.c.l.b16 %v259
      %v348 = vunpack.c.l.b16 %v260
      %v349 = vunpack.c.h.b16 %v260
      %v350 = vunpack.c.l.b16 %v261
      %v351 = vunpack.c.l.b16 %v262
      %v352 = vunpack.c.h.b16 %v262
      %v353 = vunpack.c.l.b16 %v263
      %v354 = vunpack.c.l.b16 %v264
      %v355 = vunpack.c.h.b16 %v264
      %v356 = vunpack.c.l.b16 %v265
      %v357 = vunpack.c.l.b16 %v266
      %v358 = vunpack.c.h.b16 %v266
      %v359 = vunpack.c.l.b16 %v267
      %v360 = vunpack.c.l.b16 %v268
      %v361 = vunpack.c.h.b16 %v268
      %v362 = vunpack.c.l.b16 %v269
      %v363 = vunpack.c.l.b16 %v270
      %v364 = vunpack.c.h.b16 %v270
      %v365 = vunpack.c.l.b16 %v271
      %v366 = vunpack.c.l.b16 %v272
      %v367 = vunpack.c.h.b16 %v272
      %v368 = vunpack.c.l.b16 %v273
      %v369 = vunpack.c.l.b16 %v274
      %v370 = vunpack.c.h.b16 %v274
      %v371 = vunpack.c.l.b16 %v275
      %v372 = vunpack.c.l.b16 %v276
      %v373 = vunpack.c.h.b16 %v276
      %v374 = vunpack.c.l.b16 %v277
      %v375 = vunpack.c.l.b16 %v278
      %v376 = vunpack.c.h.b16 %v278
      %v377 = vunpack.c.l.b16 %v279
      %v378 = vunpack.c.l.b16 %v280
      %v379 = vunpack.c.h.b16 %v280
      %v380 = vunpack.c.l.b16 %v281
      %v381 = vunpack.c.l.b16 %v282
      %v382 = vunpack.c.h.b16 %v282
      %v383 = vunpack.c.l.b16 %v283
      %v384 = vunpack.c.l.b16 %v284
      %v385 = vunpack.c.h.b16 %v284
      %v386 = vunpack.c.l.b16 %v285
      %v387 = vunpack.c.l.b16 %v286
      %v388 = vunpack.c.h.b16 %v286
      %v389 = vunpack.c.l.b16 %v287
      %v390 = vunpack.c.l.b16 %v288
      %v391 = vunpack.c.h.b16 %v288
      %v392 = vunpack.c.l.b16 %v289
      %v393 = vpack.c.b16 %v348, %v345
      %v394 = vpack.c.b16 %v349, %v346
      %v395 = vpack.c.b16 %v350, %v347
      %v396 = vpack.c.b16 %v354, %v351
      %v397 = vpack.c.b16 %v355, %v352
      %v398 = vpack.c.b16 %v356, %v353
      %v399 = vpack.c.b16 %v360, %v357
      %v400 = vpack.c.b16 %v361, %v358
      %v401 = vpack.c.b16 %v362, %v359
      %v402 = vpack.c.b16 %v366, %v363
      %v403 = vpack.c.b16 %v367, %v364
      %v404 = vpack.c.b16 %v368, %v365
      %v405 = vpack.c.b16 %v372, %v369
      %v406 = vpack.c.b16 %v373, %v370
      %v407 = vpack.c.b16 %v374, %v371
      %v408 = vpack.c.b16 %v378, %v375
      %v409 = vpack.c.b16 %v379, %v376
      %v410 = vpack.c.b16 %v380, %v377
      %v411 = vpack.c.b16 %v384, %v381
      %v412 = vpack.c.b16 %v385, %v382
      %v413 = vpack.c.b16 %v386, %v383
      %v414 = vpack.c.b16 %v390, %v387
      %v415 = vpack.c.b16 %v391, %v388
      %v416 = vpack.c.b16 %v392, %v389
      %441 = vmatprep.subr.bf16.mxu0 %v394
      %442 = vmatpush1.bf16.msra.mxu0 %v393
      %443 = vmatprep.subr.bf16.mxu0 %v397
      %444 = vmatpush1.bf16.msra.mxu0 %v396
      %445 = vmatprep.subr.bf16.mxu0 %v400
      %446 = vmatpush1.bf16.msra.mxu0 %v399
      %447 = vmatprep.subr.bf16.mxu0 %v403
      %448 = vmatpush1.bf16.msra.mxu0 %v402
      %449 = vmatprep.subr.bf16.mxu0 %v406
      %450 = vmatpush1.bf16.msra.mxu0 %v405
      %451 = vmatprep.subr.bf16.mxu0 %v409
      %452 = vmatpush1.bf16.msra.mxu0 %v408
      %453 = vmatprep.subr.bf16.mxu0 %v412
      %454 = vmatpush1.bf16.msra.mxu0 %v411
      %455 = vmatprep.subr.bf16.mxu0 %v415
      %456 = vmatpush1.bf16.msra.mxu0 %v414
      %457 = vmatprep.subr.bf16.mxu0 0
      %458 = vmatpush1.bf16.msra.mxu0 0
      %459 = vmatprep.subr.bf16.mxu0 0
      %460 = vmatpush1.bf16.msra.mxu0 0
      %461 = vmatprep.subr.bf16.mxu0 0
      %462 = vmatpush1.bf16.msra.mxu0 0
      %463 = vmatprep.subr.bf16.mxu0 0
      %464 = vmatpush1.bf16.msra.mxu0 0
      %465 = vmatprep.subr.bf16.mxu0 0
      %466 = vmatpush1.bf16.msra.mxu0 0
      %467 = vmatprep.subr.bf16.mxu0 0
      %468 = vmatpush1.bf16.msra.mxu0 0
      %469 = vmatprep.subr.bf16.mxu0 0
      %470 = vmatpush1.bf16.msra.mxu0 0
      %471 = vmatprep.subr.bf16.mxu0 0
      %472 = vmatpush1.bf16.msra.mxu0 0
      %473 = vmatprep.mubr.bf16.mxu0 0
      %474 = vmatmul.mubr.bf16.gmra.mrb[0].mxu0 %v311
      %v475 = vpop.f32.mrb[0].mxu0
      %v476 = vadd.f32 %v295, %v475
      %v477 = vpop.f32.mrb[0].mxu0
      %v478 = vadd.f32 %v299, %v477
      %v479 = vpop.f32.mrb[0].mxu0
      %v480 = vadd.f32 %v295, %v479
      %v481 = vpop.f32.mrb[0].mxu0
      %v482 = vadd.f32 %v299, %v481
      %483 = vdwg.mxu0
      %484 = vmatprep.subr.bf16.mxu0 0
      %485 = vmatpush1.bf16.msra.mxu0 %v395
      %486 = vmatprep.subr.bf16.mxu0 0
      %487 = vmatpush1.bf16.msra.mxu0 %v398
      %488 = vmatprep.subr.bf16.mxu0 0
      %489 = vmatpush1.bf16.msra.mxu0 %v401
      %490 = vmatprep.subr.bf16.mxu0 0
      %491 = vmatpush1.bf16.msra.mxu0 %v404
      %492 = vmatprep.subr.bf16.mxu0 0
      %493 = vmatpush1.bf16.msra.mxu0 %v407
      %494 = vmatprep.subr.bf16.mxu0 0
      %495 = vmatpush1.bf16.msra.mxu0 %v410
      %496 = vmatprep.subr.bf16.mxu0 0
      %497 = vmatpush1.bf16.msra.mxu0 %v413
      %498 = vmatprep.subr.bf16.mxu0 0
      %499 = vmatpush1.bf16.msra.mxu0 %v416
      %500 = vmatprep.subr.bf16.mxu0 0
      %501 = vmatpush1.bf16.msra.mxu0 0
      %502 = vmatprep.subr.bf16.mxu0 0
      %503 = vmatpush1.bf16.msra.mxu0 0
      %504 = vmatprep.subr.bf16.mxu0 0
      %505 = vmatpush1.bf16.msra.mxu0 0
      %506 = vmatprep.subr.bf16.mxu0 0
      %507 = vmatpush1.bf16.msra.mxu0 0
      %508 = vmatprep.subr.bf16.mxu0 0
      %509 = vmatpush1.bf16.msra.mxu0 0
      %510 = vmatprep.subr.bf16.mxu0 0
      %511 = vmatpush1.bf16.msra.mxu0 0
      %512 = vmatprep.subr.bf16.mxu0 0
      %513 = vmatpush1.bf16.msra.mxu0 0
      %514 = vmatprep.subr.bf16.mxu0 0
      %515 = vmatpush1.bf16.msra.mxu0 0
      %516 = vmatprep.mubr.bf16.mxu0 0
      %517 = vmatmul.mubr.bf16.gmra.mrb[0].mxu0 %v311
      %v518 = vpop.f32.mrb[0].mxu0
      %v519 = vadd.f32 %v303, %v518
      %v520 = vpop.f32.mrb[0].mxu0
      %v521 = vpop.f32.mrb[0].mxu0
      %v522 = vadd.f32 %v303, %v521
      %v523 = vpop.f32.mrb[0].mxu0
      %524 = vdwg.mxu0
      %v525 = vmin.f32 %v476, 20.0
      %v526 = vmin.f32 %v478, 20.0
      %v527 = vmin.f32 %v519, 20.0
      %v528 = vmin.f32 %v480, 20.0
      %v529 = vmin.f32 %v482, 20.0
      %v530 = vmin.f32 %v522, 20.0
      %v531 = vmul.f32 %v525, 1.442695
      %v532 = vpow.pop %v531
      %v533 = vmul.f32 %v526, 1.442695
      %v534 = vpow.pop %v533
      %v535 = vmul.f32 %v527, 1.442695
      %v536 = vpow.pop %v535
      %v537 = vmul.f32 %v528, 1.442695
      %v538 = vpow.pop %v537
      %v539 = vmul.f32 %v529, 1.442695
      %v540 = vpow.pop %v539
      %v541 = vmul.f32 %v530, 1.442695
      %v542 = vpow.pop %v541
      %v543 = vadd.f32 %v532, 2.0
      %v544 = vadd.f32 %v534, 2.0
      %v545 = vadd.f32 %v536, 2.0
      %v546 = vadd.f32 %v538, 2.0
      %v547 = vadd.f32 %v540, 2.0
      %v548 = vadd.f32 %v542, 2.0
      %v549 = vmul.f32 %v532, %v543
      %v550 = vmul.f32 %v534, %v544
      %v551 = vmul.f32 %v536, %v545
      %v552 = vmul.f32 %v538, %v546
      %v553 = vmul.f32 %v540, %v547
      %v554 = vmul.f32 %v542, %v548
      %v555 = vadd.f32 %v549, 2.0
      %v556 = vadd.f32 %v550, 2.0
      %v557 = vadd.f32 %v551, 2.0
      %v558 = vadd.f32 %v552, 2.0
      %v559 = vadd.f32 %v553, 2.0
      %v560 = vadd.f32 %v554, 2.0
      %v561 = vrcp.pop %v555
      %v562 = vrcp.pop %v556
      %v563 = vrcp.pop %v557
      %v564 = vrcp.pop %v558
      %v565 = vrcp.pop %v559
      %v566 = vrcp.pop %v560
      %v567 = vmul.f32 %v549, %v561
      %v568 = vmul.f32 %v550, %v562
      %v569 = vmul.f32 %v551, %v563
      %v570 = vmul.f32 %v552, %v564
      %v571 = vmul.f32 %v553, %v565
      %v572 = vmul.f32 %v554, %v566
      %v573 = vmul.f32 %v476, %v567
      %v574 = vmul.f32 %v478, %v568
      %v575 = vmul.f32 %v519, %v569
      %v576 = vmul.f32 %v480, %v570
      %v577 = vmul.f32 %v482, %v571
      %v578 = vmul.f32 %v522, %v572
      %v579 = vpack.c.bf16 %v576, %v573
      %v580 = vpack.c.bf16 %v577, %v574
      %v581 = vpack.c.bf16 %v578, %v575
      %v582 = vld [vmem:[%s3] sm:$0xf]
      %v583 = vld [vmem:[%s3 + $0x4] sm:$0xf]
      %v584 = vld [vmem:[%s3 + $0x8] sm:$0xf]
      %v585 = vld [vmem:[%s3 + $0xc] sm:$0xf]
      %v586 = vld [vmem:[%s3 + $0x10] sm:$0xf]
      %v587 = vld [vmem:[%s3 + $0x14] sm:$0xf]
      %v588 = vld [vmem:[%s3 + $0x18] sm:$0xf]
      %v589 = vld [vmem:[%s3 + $0x1c] sm:$0xf]
      %v590 = vld [vmem:[%s3 + $0x20] sm:$0xf]
      %v591 = vld [vmem:[%s3 + $0x24] sm:$0xf]
      %v592 = vld [vmem:[%s3 + $0x28] sm:$0xf]
      %v593 = vld [vmem:[%s3 + $0x2c] sm:$0xf]
      %v594 = vld [vmem:[%s3 + $0x30] sm:$0xf]
      %v595 = vld [vmem:[%s3 + $0x34] sm:$0xf]
      %v596 = vld [vmem:[%s3 + $0x38] sm:$0xf]
      %v597 = vld [vmem:[%s3 + $0x3c] sm:$0xf]
      %v598 = vld [vmem:[%s3 + $0x40] sm:$0xf]
      %v599 = vld [vmem:[%s3 + $0x44] sm:$0xf]
      %v600 = vld [vmem:[%s3 + $0x48] sm:$0xf]
      %v601 = vld [vmem:[%s3 + $0x4c] sm:$0xf]
      %v602 = vld [vmem:[%s3 + $0x50] sm:$0xf]
      %v603 = vld [vmem:[%s3 + $0x54] sm:$0xf]
      %v604 = vld [vmem:[%s3 + $0x58] sm:$0xf]
      %v605 = vld [vmem:[%s3 + $0x5c] sm:$0xf]
      %v606 = vld [vmem:[%s3 + $0x60] sm:$0xf]
      %v607 = vld [vmem:[%s3 + $0x64] sm:$0xf]
      %v608 = vld [vmem:[%s3 + $0x68] sm:$0xf]
      %v609 = vld [vmem:[%s3 + $0x6c] sm:$0xf]
      %v610 = vld [vmem:[%s3 + $0x70] sm:$0xf]
      %v611 = vld [vmem:[%s3 + $0x74] sm:$0xf]
      %v612 = vld [vmem:[%s3 + $0x78] sm:$0xf]
      %v613 = vld [vmem:[%s3 + $0x7c] sm:$0xf]
      %v614 = vld [vmem:[%s3 + $0x80] sm:$0xf]
      %v615 = vld [vmem:[%s3 + $0x84] sm:$0xf]
      %v616 = vld [vmem:[%s3 + $0x88] sm:$0xf]
      %v617 = vld [vmem:[%s3 + $0x8c] sm:$0xf]
      %v618 = vld [vmem:[%s3 + $0x90] sm:$0xf]
      %v619 = vld [vmem:[%s3 + $0x94] sm:$0xf]
      %v620 = vld [vmem:[%s3 + $0x98] sm:$0xf]
      %v621 = vld [vmem:[%s3 + $0x9c] sm:$0xf]
      %v622 = vld [vmem:[%s3 + $0xa0] sm:$0xf]
      %v623 = vld [vmem:[%s3 + $0xa4] sm:$0xf]
      %v624 = vld [vmem:[%s3 + $0xa8] sm:$0xf]
      %v625 = vld [vmem:[%s3 + $0xac] sm:$0xf]
      %v626 = vld [vmem:[%s3 + $0xb0] sm:$0xf]
      %v627 = vld [vmem:[%s3 + $0xb4] sm:$0xf]
      %v628 = vld [vmem:[%s3 + $0xb8] sm:$0xf]
      %v629 = vld [vmem:[%s3 + $0xbc] sm:$0xf]
      %v630 = vld [vmem:[%s4] sm:$0x1]
      %v632 = vlaneseq
      %v633 = vshrl.u32 %v632, 7
      %v634 = vsub.s32 0, %v633
      %v635 = vrot.slane %v630, %v634
      %v685 = vunpack.c.l.b16 %v582
      %v686 = vunpack.c.l.b16 %v583
      %v687 = vunpack.c.l.b16 %v584
      %v688 = vunpack.c.l.b16 %v585
      %v689 = vunpack.c.l.b16 %v586
      %v690 = vunpack.c.l.b16 %v587
      %v691 = vunpack.c.l.b16 %v588
      %v692 = vunpack.c.l.b16 %v589
      %v693 = vunpack.c.l.b16 %v590
      %v694 = vunpack.c.l.b16 %v591
      %v695 = vunpack.c.l.b16 %v592
      %v696 = vunpack.c.l.b16 %v593
      %v697 = vunpack.c.l.b16 %v594
      %v698 = vunpack.c.l.b16 %v595
      %v699 = vunpack.c.l.b16 %v596
      %v700 = vunpack.c.l.b16 %v597
      %v701 = vunpack.c.l.b16 %v598
      %v702 = vunpack.c.l.b16 %v599
      %v703 = vunpack.c.l.b16 %v600
      %v704 = vunpack.c.l.b16 %v601
      %v705 = vunpack.c.l.b16 %v602
      %v706 = vunpack.c.l.b16 %v603
      %v707 = vunpack.c.l.b16 %v604
      %v708 = vunpack.c.l.b16 %v605
      %v709 = vunpack.c.l.b16 %v606
      %v710 = vunpack.c.l.b16 %v607
      %v711 = vunpack.c.l.b16 %v608
      %v712 = vunpack.c.l.b16 %v609
      %v713 = vunpack.c.l.b16 %v610
      %v714 = vunpack.c.l.b16 %v611
      %v715 = vunpack.c.l.b16 %v612
      %v716 = vunpack.c.l.b16 %v613
      %v717 = vunpack.c.l.b16 %v614
      %v718 = vunpack.c.l.b16 %v615
      %v719 = vunpack.c.l.b16 %v616
      %v720 = vunpack.c.l.b16 %v617
      %v721 = vunpack.c.l.b16 %v618
      %v722 = vunpack.c.l.b16 %v619
      %v723 = vunpack.c.l.b16 %v620
      %v724 = vunpack.c.l.b16 %v621
      %v725 = vunpack.c.l.b16 %v622
      %v726 = vunpack.c.l.b16 %v623
      %v727 = vunpack.c.l.b16 %v624
      %v728 = vunpack.c.l.b16 %v625
      %v729 = vunpack.c.l.b16 %v626
      %v730 = vunpack.c.l.b16 %v627
      %v731 = vunpack.c.l.b16 %v628
      %v732 = vunpack.c.l.b16 %v629
      %v733 = vpack.c.b16 %v686, %v685
      %v734 = vpack.c.b16 %v688, %v687
      %v735 = vpack.c.b16 %v690, %v689
      %v736 = vpack.c.b16 %v692, %v691
      %v737 = vpack.c.b16 %v694, %v693
      %v738 = vpack.c.b16 %v696, %v695
      %v739 = vpack.c.b16 %v698, %v697
      %v740 = vpack.c.b16 %v700, %v699
      %v741 = vpack.c.b16 %v702, %v701
      %v742 = vpack.c.b16 %v704, %v703
      %v743 = vpack.c.b16 %v706, %v705
      %v744 = vpack.c.b16 %v708, %v707
      %v745 = vpack.c.b16 %v710, %v709
      %v746 = vpack.c.b16 %v712, %v711
      %v747 = vpack.c.b16 %v714, %v713
      %v748 = vpack.c.b16 %v716, %v715
      %v749 = vpack.c.b16 %v718, %v717
      %v750 = vpack.c.b16 %v720, %v719
      %v751 = vpack.c.b16 %v722, %v721
      %v752 = vpack.c.b16 %v724, %v723
      %v753 = vpack.c.b16 %v726, %v725
      %v754 = vpack.c.b16 %v728, %v727
      %v755 = vpack.c.b16 %v730, %v729
      %v756 = vpack.c.b16 %v732, %v731
      %781 = vmatprep.subr.bf16.mxu0 0
      %782 = vmatpush1.bf16.msra.mxu0 %v733
      %783 = vmatprep.subr.bf16.mxu0 0
      %784 = vmatpush1.bf16.msra.mxu0 %v734
      %785 = vmatprep.subr.bf16.mxu0 0
      %786 = vmatpush1.bf16.msra.mxu0 %v735
      %787 = vmatprep.subr.bf16.mxu0 0
      %788 = vmatpush1.bf16.msra.mxu0 %v736
      %789 = vmatprep.subr.bf16.mxu0 0
      %790 = vmatpush1.bf16.msra.mxu0 %v737
      %791 = vmatprep.subr.bf16.mxu0 0
      %792 = vmatpush1.bf16.msra.mxu0 %v738
      %793 = vmatprep.subr.bf16.mxu0 0
      %794 = vmatpush1.bf16.msra.mxu0 %v739
      %795 = vmatprep.subr.bf16.mxu0 0
      %796 = vmatpush1.bf16.msra.mxu0 %v740
      %797 = vmatprep.subr.bf16.mxu0 0
      %798 = vmatpush1.bf16.msra.mxu0 %v741
      %799 = vmatprep.subr.bf16.mxu0 0
      %800 = vmatpush1.bf16.msra.mxu0 %v742
      %801 = vmatprep.subr.bf16.mxu0 0
      %802 = vmatpush1.bf16.msra.mxu0 %v743
      %803 = vmatprep.subr.bf16.mxu0 0
      %804 = vmatpush1.bf16.msra.mxu0 %v744
      %805 = vmatprep.subr.bf16.mxu0 0
      %806 = vmatpush1.bf16.msra.mxu0 %v745
      %807 = vmatprep.subr.bf16.mxu0 0
      %808 = vmatpush1.bf16.msra.mxu0 %v746
      %809 = vmatprep.subr.bf16.mxu0 0
      %810 = vmatpush1.bf16.msra.mxu0 %v747
      %811 = vmatprep.subr.bf16.mxu0 0
      %812 = vmatpush1.bf16.msra.mxu0 %v748
      %813 = vmatprep.mubr.bf16.mxu0 %v580
      %814 = vmatmul.mubr.bf16.gmra.mrb[0].mxu0 %v579
      %v815 = vpop.f32.mrb[0].mxu0
      %v816 = vadd.f32 %v635, %v815
      %v817 = vpop.f32.mrb[0].mxu0
      %v818 = vpop.f32.mrb[0].mxu0
      %v819 = vadd.f32 %v635, %v818
      %v820 = vpop.f32.mrb[0].mxu0
      %821 = vdwg.mxu0
      %822 = vmatprep.subr.bf16.mxu0 0
      %823 = vmatpush1.bf16.msra.mxu0 %v749
      %824 = vmatprep.subr.bf16.mxu0 0
      %825 = vmatpush1.bf16.msra.mxu0 %v750
      %826 = vmatprep.subr.bf16.mxu0 0
      %827 = vmatpush1.bf16.msra.mxu0 %v751
      %828 = vmatprep.subr.bf16.mxu0 0
      %829 = vmatpush1.bf16.msra.mxu0 %v752
      %830 = vmatprep.subr.bf16.mxu0 0
      %831 = vmatpush1.bf16.msra.mxu0 %v753
      %832 = vmatprep.subr.bf16.mxu0 0
      %833 = vmatpush1.bf16.msra.mxu0 %v754
      %834 = vmatprep.subr.bf16.mxu0 0
      %835 = vmatpush1.bf16.msra.mxu0 %v755
      %836 = vmatprep.subr.bf16.mxu0 0
      %837 = vmatpush1.bf16.msra.mxu0 %v756
      %838 = vmatprep.subr.bf16.mxu0 0
      %839 = vmatpush1.bf16.msra.mxu0 0
      %840 = vmatprep.subr.bf16.mxu0 0
      %841 = vmatpush1.bf16.msra.mxu0 0
      %842 = vmatprep.subr.bf16.mxu0 0
      %843 = vmatpush1.bf16.msra.mxu0 0
      %844 = vmatprep.subr.bf16.mxu0 0
      %845 = vmatpush1.bf16.msra.mxu0 0
      %846 = vmatprep.subr.bf16.mxu0 0
      %847 = vmatpush1.bf16.msra.mxu0 0
      %848 = vmatprep.subr.bf16.mxu0 0
      %849 = vmatpush1.bf16.msra.mxu0 0
      %850 = vmatprep.subr.bf16.mxu0 0
      %851 = vmatpush1.bf16.msra.mxu0 0
      %852 = vmatprep.subr.bf16.mxu0 0
      %853 = vmatpush1.bf16.msra.mxu0 0
      %854 = vmatprep.mubr.bf16.mxu0 0
      %855 = vmatmul.mubr.bf16.gmra.mrb[0].mxu0 %v581
      %v856 = vpop.f32.mrb[0].mxu0
      %v857 = vadd.f32 %v816, %v856
      %v858 = vpop.f32.mrb[0].mxu0
      %v859 = vpop.f32.mrb[0].mxu0
      %v860 = vadd.f32 %v819, %v859
      %v861 = vpop.f32.mrb[0].mxu0
      %862 = vdwg.mxu0
      %v863 = vld [vmem:[%s5] sm:$0xff]
      %v864 = vld [vmem:[%s5 + $0x8] sm:$0xff]
      %v865 = vadd.f32 %v857, %v863
      %v866 = vadd.f32 %v860, %v864
      %867 = vst [vmem:[%s253] sm:$0xff] %v865
      %868 = vst [vmem:[%s253 + $0x8] sm:$0xff] %v866
      %s869 = smul.u32 2, %s17
      %p870 = scmp.lt.s32.totalorder %s869, 3
      %s871 = scalar_select %p870, %s869, 3
      %s872 = smul.addr %s871, 8
      %s873 = scalar_lea.vmem %s6, %s872
      // Predicated region
      $region45: #{event_encoder.1} parent=43 // pred_check
        %p874 = pneg %p166
      $region46: #{event_encoder.1} parent=43 // pred_check_branch
        %876 = sbr.rel (%p874) target = $region48
      $region47: #{event_encoder.1} parent=43 // pred_region
        %s877 = smul.u32 2, %s17
      $region48: #{event_encoder.1} parent=43 // pred_fallthru
        _
    $region44: #{event_encoder.1} parent=5 // pred_fallthru
      _
    %p878 = scmp.le.s32.totalorder 2, %s12
    // Predicated region
    $region49: #{event_encoder.1} parent=5 // pred_check
      %p879 = pneg %p878
    $region50: #{event_encoder.1} parent=5 // pred_check_branch
      %881 = sbr.rel (%p879) target = $region52
    $region51: #{event_encoder.1} parent=5 // pred_region
      %s882 = ssub.s32 %s12, 2
      // Predicated region
      $region53: #{event_encoder.1} parent=51 // pred_check
        %p883 = pneg %p172
      $region54: #{event_encoder.1} parent=51 // pred_check_branch
        %885 = sbr.rel (%p883) target = $region56
      $region55: #{event_encoder.1} parent=51 // pred_region
        %s886 = smul.u32 2, %s18
        %p887 = scmp.lt.s32.totalorder %s886, 3
        %s888 = scalar_select %p887, %s886, 3
        %s889 = smul.addr %s888, 8
        %s890 = scalar_lea.vmem %s6, %s889
      $region56: #{event_encoder.1} parent=51 // pred_fallthru
        _
    $region52: #{event_encoder.1} parent=5 // pred_fallthru
      _
  $region6: #{event_encoder.1} parent=0 // loop_footer
    %s16 = sadd.s32 1, %s12
  $region7: #{event_encoder.1} parent=0 // loop_footer_branch
    %11 = sbr.rel target = $region3
  $region8: #{event_encoder.1} parent=0 // loop_exit
    _

</llo_original>
